<compile_context>
chip_gen: v7x
topology: tpu7x:2x2x1
jax: 0.10.0
libtpu: 0.0.40
codegen_flags: <defaults>
</compile_context>

<pallas_src>
import functools

import jax
import jax.numpy as jnp
import numpy as np
from jax import lax
from jax.experimental import pallas as pl
from jax.experimental.pallas import tpu as pltpu

LANE = 128


def _cdiv(a, b):
    return -(-a // b)


def _round_up(n, m):
    return _cdiv(n, m) * m


def _default_elementwise_dtype():
    """bf16 elementwise on chips with a bf16 VPU (v6e / v7x); f32 otherwise."""
    try:
        kind = jax.devices()[0].device_kind.lower()
    except Exception:
        return jnp.float32
    if any(tag in kind for tag in ("v6", "v7", "7x")):
        return jnp.bfloat16
    return jnp.float32


def _plan_tiles(B, tile_b_max):
    """Choose (tile_b, grid_steps, padded_B).

    Large lane-aligned batch tiles amortize the per-grid-step overhead; when
    the batch allows it we keep >= 2 (even) grid steps so
    dimension_semantics=("parallel",) can shard them across both v7x
    TensorCores.  No effect on v5e/v6e (single TC)."""
    tile_b = _round_up(min(tile_b_max, _round_up(B, LANE)), LANE)
    steps = _cdiv(B, tile_b)
    if B > LANE and (steps < 2 or steps % 2):
        target = 2 if steps < 2 else steps + 1
        tile_b = _round_up(_cdiv(B, target), LANE)
        steps = _cdiv(B, tile_b)
    return tile_b, steps, steps * tile_b


def mlp_kernel(x_ref, w1_ref, w2_ref, w3_ref, c_ref, o_ref, *, ew_dtype):
    """One (tile_b, 8) batch tile -> one lane-dense (1, tile_b) output block.

    c_ref packs [b1; b2; b3; w4_row; b4_row; 0; 0; 0] as an (8, Hp) f32 tile.
    The fc2/fc3 residuals are already folded into the resident weights
    (W + I), so the body is 3x (MXU matmul -> bias -> ReLU) plus a lane-dense
    fc4 contraction.
    """
    x = x_ref[...]                                  # (tile_b, 8) bf16
    b1 = c_ref[0:1, :].astype(ew_dtype)             # (1, Hp)
    b2 = c_ref[1:2, :].astype(ew_dtype)
    b3 = c_ref[2:3, :].astype(ew_dtype)
    w4 = c_ref[3:4, :]                              # (1, Hp) f32
    b4 = c_ref[4:5, 0:1]                            # (1, 1)  f32

    # fc1 + bias + ReLU (bf16 MXU operands, f32 accumulation).
    h = jnp.dot(x, w1_ref[...], preferred_element_type=jnp.float32)
    h = jnp.maximum(h.astype(ew_dtype) + b1, 0.0)

    # fc2 with the residual folded into the weights (W2 + I).
    h = jnp.dot(h.astype(jnp.bfloat16), w2_ref[...],
                preferred_element_type=jnp.float32)
    h = jnp.maximum(h.astype(ew_dtype) + b2, 0.0)

    # fc3 with the residual folded into the weights (W3 + I).
    h = jnp.dot(h.astype(jnp.bfloat16), w3_ref[...],
                preferred_element_type=jnp.float32)
    h = jnp.maximum(h.astype(ew_dtype) + b3, 0.0)

    # fc4: contract the hidden dim of w4 (1, Hp) against the hidden dim of h
    # (tile_b, Hp) -> (1, tile_b).  The batch lands in the LANE dimension, so
    # the output store is full-width (no masked vst.msk column writes) and the
    # output DMA is contiguous.
    o_ref[...] = lax.dot_general(
        w4, h.astype(jnp.float32),
        dimension_numbers=(((1,), (1,)), ((), ())),
        preferred_element_type=jnp.float32) + b4


def prepare_params(params, lane=LANE):
    """Pad the hidden dim to a lane multiple, fold the residual connections
    into W2/W3 (in f32, before the bf16 cast), cast MXU weights to bf16 and
    pack the small per-layer constants into a single (8, Hp) f32 tile."""
    H = params["w1"].shape[1]
    Hp = _round_up(max(H, lane), lane)
    eye = jnp.eye(H, dtype=jnp.float32)

    def padc(a):  # pad columns to Hp
        return jnp.pad(a, ((0, 0), (0, Hp - a.shape[1])))

    def pad_sq(a):
        return jnp.pad(a, ((0, Hp - H), (0, Hp - H)))

    w1 = padc(params["w1"]).astype(jnp.bfloat16)                      # (8, Hp)
    # relu(h + fc2(h)) == relu(h @ (W2 + I) + b2): fold the residual so the
    # kernel skips two full (tile_b, Hp) elementwise add passes.  Padded
    # rows/cols stay zero, so padded hidden columns remain exactly 0.
    w2 = pad_sq(params["w2"] + eye).astype(jnp.bfloat16)              # (Hp, Hp)
    w3 = pad_sq(params["w3"] + eye).astype(jnp.bfloat16)              # (Hp, Hp)

    b1 = padc(params["b1"].reshape(1, H))
    b2 = padc(params["b2"].reshape(1, H))
    b3 = padc(params["b3"].reshape(1, H))
    w4r = padc(params["w4"].reshape(H, 1).T)                          # (1, Hp)
    b4r = jnp.broadcast_to(params["b4"].reshape(1, 1), (1, Hp))
    zeros = jnp.zeros((3, Hp), jnp.float32)
    consts = jnp.concatenate([b1, b2, b3, w4r, b4r, zeros],
                             axis=0).astype(jnp.float32)              # (8, Hp)
    return {"w1": w1, "w2": w2, "w3": w3, "consts": consts}


def mlp_forward(x, prepared, *, tile_b=1024, ew_dtype=None):
    """x: (B, 8) f32; prepared: output of prepare_params. Returns (B, 1) f32."""
    B, F = x.shape
    if ew_dtype is None:
        ew_dtype = _default_elementwise_dtype()
    w1, w2, w3, consts = (prepared["w1"], prepared["w2"],
                          prepared["w3"], prepared["consts"])
    Hp = w1.shape[1]

    tile_b, steps, b_pad = _plan_tiles(B, tile_b)
    xp = x if b_pad == B else jnp.pad(x, ((0, b_pad - B), (0, 0)))
    xp = xp.astype(jnp.bfloat16)   # halve HBM bytes on the streamed input

    flops = 2 * b_pad * (F * Hp + 2 * Hp * Hp + Hp)
    bytes_accessed = (xp.size * 2 + b_pad * 4
                      + (w1.size + w2.size + w3.size) * 2 + consts.size * 4)

    out = pl.pallas_call(
        functools.partial(mlp_kernel, ew_dtype=ew_dtype),
        # Lane-dense output: one (1, b_pad) row, each grid step fills its own
        # tile_b-wide column block.
        out_shape=jax.ShapeDtypeStruct((1, b_pad), jnp.float32),
        grid=(steps,),
        in_specs=[
            # streamed: one batch tile per grid step (double-buffered).
            pl.BlockSpec((tile_b, F), lambda i: (i, 0)),
            # resident: constant block index -> DMA'd once, stays in VMEM.
            pl.BlockSpec(w1.shape, lambda i: (0, 0)),
            pl.BlockSpec(w2.shape, lambda i: (0, 0)),
            pl.BlockSpec(w3.shape, lambda i: (0, 0)),
            pl.BlockSpec(consts.shape, lambda i: (0, 0)),
        ],
        out_specs=pl.BlockSpec((1, tile_b), lambda i: (0, i)),
        compiler_params=pltpu.CompilerParams(
            # shard the (even, >=2 step) batch grid across both v7x TCs
            dimension_semantics=("parallel",),
            # explicit scoped-VMEM budget: above v5e's 16 MiB default, under
            # v7x's 64 MiB physical VMEM; depth-2 buffering is plenty here.
            vmem_limit_bytes=32 * 1024 * 1024,
        ),
        cost_estimate=pl.CostEstimate(
            flops=int(flops), transcendentals=0,
            bytes_accessed=int(bytes_accessed)),
    )(xp, w1, w2, w3, consts)
    return out[0, :B].reshape(B, 1)


def make_params(hidden_size, key):
    """Deterministic synthetic parameters matching nn.Linear shapes.

    torch fc_k.weight is (out, in); we store the transpose (in, out).
    Biases are stored as (1, out)."""
    ks = jax.random.split(key, 8)

    def w(k, fan_in, fan_out):
        bound = 1.0 / np.sqrt(fan_in)
        return jax.random.uniform(k, (fan_in, fan_out), jnp.float32, -bound, bound)

    def b(k, fan_in, fan_out):
        bound = 1.0 / np.sqrt(fan_in)
        return jax.random.uniform(k, (1, fan_out), jnp.float32, -bound, bound)

    H = hidden_size
    return {
        "w1": w(ks[0], 8, H), "b1": b(ks[1], 8, H),
        "w2": w(ks[2], H, H), "b2": b(ks[3], H, H),
        "w3": w(ks[4], H, H), "b3": b(ks[5], H, H),
        "w4": w(ks[6], H, 1), "b4": b(ks[7], H, 1),
    }


def mlp_reference_f32(x, p):
    """Exact PyTorch-module semantics in full f32."""
    hi = jax.lax.Precision.HIGHEST
    h = jnp.maximum(jnp.dot(x, p["w1"], precision=hi) + p["b1"], 0.0)
    h = jnp.maximum(h + jnp.dot(h, p["w2"], precision=hi) + p["b2"], 0.0)
    h = jnp.maximum(h + jnp.dot(h, p["w3"], precision=hi) + p["b3"], 0.0)
    return jnp.dot(h, p["w4"], precision=hi) + p["b4"]


def mlp_reference_mxu(x, prepared, ew_dtype):
    """Mirror the kernel's math exactly (padded/folded weights, bf16 MXU
    operands, f32 accumulation, ew_dtype elementwise) in plain JAX."""
    w1, w2, w3, c = (prepared["w1"], prepared["w2"],
                     prepared["w3"], prepared["consts"])
    b1, b2, b3 = c[0:1, :], c[1:2, :], c[2:3, :]
    w4, b4 = c[3:4, :], c[4, 0]

    h = jnp.dot(x.astype(jnp.bfloat16), w1, preferred_element_type=jnp.float32)
    h = jnp.maximum(h.astype(ew_dtype) + b1.astype(ew_dtype), 0.0)
    h = jnp.dot(h.astype(jnp.bfloat16), w2, preferred_element_type=jnp.float32)
    h = jnp.maximum(h.astype(ew_dtype) + b2.astype(ew_dtype), 0.0)
    h = jnp.dot(h.astype(jnp.bfloat16), w3, preferred_element_type=jnp.float32)
    h = jnp.maximum(h.astype(ew_dtype) + b3.astype(ew_dtype), 0.0)
    return jnp.dot(h.astype(jnp.float32), w4.T) + b4


if __name__ == "__main__":
    key = jax.random.PRNGKey(0)
    k_x, k_p = jax.random.split(key)

    batch = 500          # not a tile multiple: exercises batch padding
    hidden_size = 32     # padded to 128 lanes inside prepare_params

    x = jax.random.normal(k_x, (batch, 8), jnp.float32)
    params = make_params(hidden_size, k_p)
    prepared = prepare_params(params)

    ew_dtype = _default_elementwise_dtype()
    # Default tile_b=1024 gets capped by the planner to an even 2-step grid
    # (tile_b=256) for batch=500.
    out = mlp_forward(x, prepared, ew_dtype=ew_dtype)
    out = jax.block_until_ready(out)
    assert out.shape == (batch, 1)

    # Tight check against a reference mirroring the kernel's exact precision.
    tol = 1e-3 if ew_dtype == jnp.float32 else 2e-2
    ref_mxu = mlp_reference_mxu(x, prepared, ew_dtype)
    np.testing.assert_allclose(np.asarray(out), np.asarray(ref_mxu),
                               rtol=tol, atol=tol)

    # Loose check against the exact f32 PyTorch-module semantics.
    ref_f32 = mlp_reference_f32(x, params)
    np.testing.assert_allclose(np.asarray(out), np.asarray(ref_f32),
                               rtol=5e-2, atol=5e-2)

    print("KERNEL_OK")
</pallas_src>

<mosaic_0001>
module attributes {stable_mosaic.version = 11 : i64} {
  func.func @mlp_kernel(%arg0: i32, %arg1: memref<256x8xbf16, #tpu.memory_space<vmem>>, %arg2: memref<8x128xbf16, #tpu.memory_space<vmem>>, %arg3: memref<128x128xbf16, #tpu.memory_space<vmem>>, %arg4: memref<128x128xbf16, #tpu.memory_space<vmem>>, %arg5: memref<8x128xf32, #tpu.memory_space<vmem>>, %arg6: memref<1x256xf32, #tpu.memory_space<vmem>>) attributes {dimension_semantics = [#tpu.dimension_semantics<parallel>], iteration_bounds = array<i64: 2>, scalar_prefetch = 0 : i64, scratch_operands = 0 : i64, tpu.core_type = #tpu.core_type<tc>, window_params = [{transform_indices = @transform_0, window_bounds = array<i64: 256, 8>}, {pipeline_mode = #tpu.pipeline_mode<synchronous>, transform_indices = @transform_1, window_bounds = array<i64: 8, 128>}, {pipeline_mode = #tpu.pipeline_mode<synchronous>, transform_indices = @transform_2, window_bounds = array<i64: 128, 128>}, {pipeline_mode = #tpu.pipeline_mode<synchronous>, transform_indices = @transform_3, window_bounds = array<i64: 128, 128>}, {pipeline_mode = #tpu.pipeline_mode<synchronous>, transform_indices = @transform_4, window_bounds = array<i64: 8, 128>}, {transform_indices = @transform_5, window_bounds = array<i64: 1, 256>}]} {
    %c0 = arith.constant 0 : index
    %c0_0 = arith.constant 0 : index
    %0 = vector.load %arg1[%c0, %c0_0] : memref<256x8xbf16, #tpu.memory_space<vmem>>, vector<256x8xbf16>
    %c0_1 = arith.constant 0 : index
    %c0_2 = arith.constant 0 : index
    %1 = vector.load %arg5[%c0_1, %c0_2] : memref<8x128xf32, #tpu.memory_space<vmem>>, vector<1x128xf32>
    %c1 = arith.constant 1 : index
    %c0_3 = arith.constant 0 : index
    %2 = vector.load %arg5[%c1, %c0_3] : memref<8x128xf32, #tpu.memory_space<vmem>>, vector<1x128xf32>
    %c2 = arith.constant 2 : index
    %c0_4 = arith.constant 0 : index
    %3 = vector.load %arg5[%c2, %c0_4] : memref<8x128xf32, #tpu.memory_space<vmem>>, vector<1x128xf32>
    %c3 = arith.constant 3 : index
    %c0_5 = arith.constant 0 : index
    %4 = vector.load %arg5[%c3, %c0_5] : memref<8x128xf32, #tpu.memory_space<vmem>>, vector<1x128xf32>
    %c4 = arith.constant 4 : index
    %c0_6 = arith.constant 0 : index
    %5 = vector.load %arg5[%c4, %c0_6] : memref<8x128xf32, #tpu.memory_space<vmem>>, vector<1x1xf32>
    %c0_7 = arith.constant 0 : index
    %c0_8 = arith.constant 0 : index
    %6 = vector.load %arg2[%c0_7, %c0_8] : memref<8x128xbf16, #tpu.memory_space<vmem>>, vector<8x128xbf16>
    %cst = arith.constant dense<0.000000e+00> : vector<256x128xf32>
    %7 = tpu.matmul %0, %6, %cst {dimension_numbers = #tpu.dot_dimension_numbers<[1], [0], [0], [1], [0, 0, 1, 1], [], []>} : vector<256x8xbf16>, vector<8x128xbf16>, vector<256x128xf32> -> vector<256x128xf32>
    %8 = vector.broadcast %1 : vector<1x128xf32> to vector<256x128xf32>
    %9 = arith.addf %7, %8 : vector<256x128xf32>
    %cst_9 = arith.constant 0.000000e+00 : f32
    %10 = vector.broadcast %cst_9 : f32 to vector<256x128xf32>
    %11 = arith.maximumf %9, %10 : vector<256x128xf32>
    %12 = arith.truncf %11 : vector<256x128xf32> to vector<256x128xbf16>
    %c0_10 = arith.constant 0 : index
    %c0_11 = arith.constant 0 : index
    %13 = vector.load %arg3[%c0_10, %c0_11] : memref<128x128xbf16, #tpu.memory_space<vmem>>, vector<128x128xbf16>
    %cst_12 = arith.constant dense<0.000000e+00> : vector<256x128xf32>
    %14 = tpu.matmul %12, %13, %cst_12 {dimension_numbers = #tpu.dot_dimension_numbers<[1], [0], [0], [1], [0, 0, 1, 1], [], []>} : vector<256x128xbf16>, vector<128x128xbf16>, vector<256x128xf32> -> vector<256x128xf32>
    %15 = vector.broadcast %2 : vector<1x128xf32> to vector<256x128xf32>
    %16 = arith.addf %14, %15 : vector<256x128xf32>
    %cst_13 = arith.constant 0.000000e+00 : f32
    %17 = vector.broadcast %cst_13 : f32 to vector<256x128xf32>
    %18 = arith.maximumf %16, %17 : vector<256x128xf32>
    %19 = arith.truncf %18 : vector<256x128xf32> to vector<256x128xbf16>
    %c0_14 = arith.constant 0 : index
    %c0_15 = arith.constant 0 : index
    %20 = vector.load %arg4[%c0_14, %c0_15] : memref<128x128xbf16, #tpu.memory_space<vmem>>, vector<128x128xbf16>
    %cst_16 = arith.constant dense<0.000000e+00> : vector<256x128xf32>
    %21 = tpu.matmul %19, %20, %cst_16 {dimension_numbers = #tpu.dot_dimension_numbers<[1], [0], [0], [1], [0, 0, 1, 1], [], []>} : vector<256x128xbf16>, vector<128x128xbf16>, vector<256x128xf32> -> vector<256x128xf32>
    %22 = vector.broadcast %3 : vector<1x128xf32> to vector<256x128xf32>
    %23 = arith.addf %21, %22 : vector<256x128xf32>
    %cst_17 = arith.constant 0.000000e+00 : f32
    %24 = vector.broadcast %cst_17 : f32 to vector<256x128xf32>
    %25 = arith.maximumf %23, %24 : vector<256x128xf32>
    %cst_18 = arith.constant dense<0.000000e+00> : vector<1x256xf32>
    %26 = tpu.matmul %4, %25, %cst_18 {dimension_numbers = #tpu.dot_dimension_numbers<[1], [1], [0], [0], [0, 0, 1, 0], [], []>} : vector<1x128xf32>, vector<256x128xf32>, vector<1x256xf32> -> vector<1x256xf32>
    %27 = vector.broadcast %5 : vector<1x1xf32> to vector<1x256xf32>
    %28 = arith.addf %26, %27 : vector<1x256xf32>
    %c0_19 = arith.constant 0 : index
    %c0_20 = arith.constant 0 : index
    %29 = vector.load %arg6[%c0_19, %c0_20] : memref<1x256xf32, #tpu.memory_space<vmem>>, vector<1x256xf32>
    tpu.vector_store %arg6[%c0_19, %c0_20], %28 {strides = array<i32>} : memref<1x256xf32, #tpu.memory_space<vmem>>, vector<1x256xf32>,
    return
  }
  func.func @transform_0(%arg0: i32) -> (i32, i32) {
    %c0_i32 = arith.constant 0 : i32
    %c0_i32_0 = arith.constant 0 : i32
    return %arg0, %c0_i32 : i32, i32
  }
  func.func @transform_1(%arg0: i32) -> (i32, i32) {
    %c0_i32 = arith.constant 0 : i32
    %c0_i32_0 = arith.constant 0 : i32
    %c0_i32_1 = arith.constant 0 : i32
    return %c0_i32, %c0_i32_0 : i32, i32
  }
  func.func @transform_2(%arg0: i32) -> (i32, i32) {
    %c0_i32 = arith.constant 0 : i32
    %c0_i32_0 = arith.constant 0 : i32
    %c0_i32_1 = arith.constant 0 : i32
    return %c0_i32, %c0_i32_0 : i32, i32
  }
  func.func @transform_3(%arg0: i32) -> (i32, i32) {
    %c0_i32 = arith.constant 0 : i32
    %c0_i32_0 = arith.constant 0 : i32
    %c0_i32_1 = arith.constant 0 : i32
    return %c0_i32, %c0_i32_0 : i32, i32
  }
  func.func @transform_4(%arg0: i32) -> (i32, i32) {
    %c0_i32 = arith.constant 0 : i32
    %c0_i32_0 = arith.constant 0 : i32
    %c0_i32_1 = arith.constant 0 : i32
    return %c0_i32, %c0_i32_0 : i32, i32
  }
  func.func @transform_5(%arg0: i32) -> (i32, i32) {
    %c0_i32 = arith.constant 0 : i32
    %c0_i32_0 = arith.constant 0 : i32
    return %c0_i32, %arg0 : i32, i32
  }
}

</mosaic_0001>

<llo_original>
// kernel: tpu_custom_call.1
$region0: #{tpu_custom_call.1}
  #allocation0 [shape = 'u32[]', space=smem, size = 0x4, offset = 0x4, fixed_abs, tag = 'smem constant byte address 0x4 - core index']
  #allocation1 [shape = 'u32[144,128]{1,0:T(1,128)}', space=vmem, size = 0x12000, scoped, tag = 'internal scratch']
  %s0 = inlined_call_operand.vmem [shape: bf16[512,8], index: 0, kind: input, shape index: {}]
  %s1 = inlined_call_operand.vmem [shape: bf16[8,128], index: 1, kind: input, shape index: {}]
  %s2 = inlined_call_operand.vmem [shape: bf16[128,128], index: 2, kind: input, shape index: {}]
  %s3 = inlined_call_operand.vmem [shape: bf16[128,128], index: 3, kind: input, shape index: {}]
  %s4 = inlined_call_operand.vmem [shape: f32[8,128], index: 4, kind: input, shape index: {}]
  %s5 = inlined_call_operand.hbm [shape: f32[1,512], index: 5, kind: output, shape index: {}]
  %s6 = sld [smem:[#allocation0]]
  $region53: #{tpu_custom_call.1} parent=0
    _
  %s8 = ssub.s32 1, %s6
  %s9 = scalar_select 0, %s8, %s6
  $region1: #{tpu_custom_call.1} parent=0
    #allocation2 [shape = 'u8[2048]{0}', space=vmem, size = 0x800, scoped, tag = 'output window, operand 0']
    #allocation3 [shape = 's32[2]{0}', space=sflag, size = 0x8, scoped, tag = 'scoped memory for tpu_custom_call.1']
    %10 = vsyncpa [#allocation3], 0
    %s11 = scalar_lea.sflag [#allocation3], 1
    %12 = vsyncpa %s11, 0
    loop: start=0, step=1, limit=4
    $region2: #{tpu_custom_call.1} parent=1 // loop_pre_header
      _
    $region3: #{tpu_custom_call.1} parent=1 // loop_header
      %s14 = sphi 0, %s18
      %p15 = scmp.ge.s32.totalorder %s14, 4
      %s24 = sphi 0, %s26
      %s27 = sphi 0, %s24
      %s28 = sphi 0, %s27
      %s44 = sphi 0, %s28
      %s48 = sphi 0, %s48
      %s50 = sphi 0, %s48
      %s51 = sphi 0, %s50
      %s65 = sphi 0, %s51
      %s69 = sphi 0, %s69
      %s71 = sphi 0, %s69
      %s72 = sphi 0, %s71
      %s86 = sphi 0, %s72
      %s90 = sphi 0, %s90
      %s92 = sphi 0, %s90
      %s93 = sphi 0, %s92
      %s107 = sphi 0, %s93
      %s111 = sphi 0, %s111
      %s113 = sphi 0, %s111
      %s114 = sphi 0, %s113
      %s128 = sphi 0, %s114
      %s134 = sphi 0, %s136
      %s137 = sphi 0, %s134
      %s138 = sphi 0, %s137
      %s154 = sphi 0, %s138
    $region4: #{tpu_custom_call.1} parent=1 // loop_header_branch
      %17 = sbr.rel (%p15) target = $region8
    $region5: #{tpu_custom_call.1} parent=1 // loop_body
      %s19 = ssub.s32 %s14, 1
      %s20 = ssub.s32 %s14, 2
      %s21 = sadd.s32 %s14, 1
      %s22 = ssub.s32 %s14, %s21
      %p23 = scmp.eq.s32.totalorder %s22, 0
      %s25 = sadd.s32 %s24, 1
      %s26 = scalar_select %p23, %s24, %s25
      %p29 = pneg %p23
      %p30 = scmp.eq.s32.totalorder %s14, 1
      %p31 = por %p29, %p30
      %p32 = scmp.ne.s32.totalorder %s24, %s27
      %p33 = scmp.eq.s32.totalorder %s14, 0
      %p34 = por %p32, %p33
      %p35 = scmp.ne.s32.totalorder %s24, %s27
      %p36 = scmp.eq.s32.totalorder %s19, 1
      %p37 = por %p35, %p36
      %p38 = scmp.ne.s32.totalorder %s27, %s28
      %p39 = scmp.eq.s32.totalorder %s19, 0
      %p40 = por %p38, %p39
      %p41 = scmp.ne.s32.totalorder %s27, %s28
      %p42 = scmp.eq.s32.totalorder %s20, 1
      %p43 = por %p41, %p42
      %p45 = scmp.ne.s32.totalorder %s28, %s44
      %p46 = scmp.eq.s32.totalorder %s20, 0
      %p47 = por %p45, %p46
      %s49 = sadd.s32 %s48, 1
      %p52 = scmp.eq.s32.totalorder %s14, 1
      %p53 = scmp.ne.s32.totalorder %s48, %s50
      %p54 = scmp.eq.s32.totalorder %s14, 0
      %p55 = por %p53, %p54
      %p56 = scmp.ne.s32.totalorder %s48, %s50
      %p57 = scmp.eq.s32.totalorder %s19, 1
      %p58 = por %p56, %p57
      %p59 = scmp.ne.s32.totalorder %s50, %s51
      %p60 = scmp.eq.s32.totalorder %s19, 0
      %p61 = por %p59, %p60
      %p62 = scmp.ne.s32.totalorder %s50, %s51
      %p63 = scmp.eq.s32.totalorder %s20, 1
      %p64 = por %p62, %p63
      %p66 = scmp.ne.s32.totalorder %s51, %s65
      %p67 = scmp.eq.s32.totalorder %s20, 0
      %p68 = por %p66, %p67
      %s70 = sadd.s32 %s69, 1
      %p73 = scmp.eq.s32.totalorder %s14, 1
      %p74 = scmp.ne.s32.totalorder %s69, %s71
      %p75 = scmp.eq.s32.totalorder %s14, 0
      %p76 = por %p74, %p75
      %p77 = scmp.ne.s32.totalorder %s69, %s71
      %p78 = scmp.eq.s32.totalorder %s19, 1
      %p79 = por %p77, %p78
      %p80 = scmp.ne.s32.totalorder %s71, %s72
      %p81 = scmp.eq.s32.totalorder %s19, 0
      %p82 = por %p80, %p81
      %p83 = scmp.ne.s32.totalorder %s71, %s72
      %p84 = scmp.eq.s32.totalorder %s20, 1
      %p85 = por %p83, %p84
      %p87 = scmp.ne.s32.totalorder %s72, %s86
      %p88 = scmp.eq.s32.totalorder %s20, 0
      %p89 = por %p87, %p88
      %s91 = sadd.s32 %s90, 1
      %p94 = scmp.eq.s32.totalorder %s14, 1
      %p95 = scmp.ne.s32.totalorder %s90, %s92
      %p96 = scmp.eq.s32.totalorder %s14, 0
      %p97 = por %p95, %p96
      %p98 = scmp.ne.s32.totalorder %s90, %s92
      %p99 = scmp.eq.s32.totalorder %s19, 1
      %p100 = por %p98, %p99
      %p101 = scmp.ne.s32.totalorder %s92, %s93
      %p102 = scmp.eq.s32.totalorder %s19, 0
      %p103 = por %p101, %p102
      %p104 = scmp.ne.s32.totalorder %s92, %s93
      %p105 = scmp.eq.s32.totalorder %s20, 1
      %p106 = por %p104, %p105
      %p108 = scmp.ne.s32.totalorder %s93, %s107
      %p109 = scmp.eq.s32.totalorder %s20, 0
      %p110 = por %p108, %p109
      %s112 = sadd.s32 %s111, 1
      %p115 = scmp.eq.s32.totalorder %s14, 1
      %p116 = scmp.ne.s32.totalorder %s111, %s113
      %p117 = scmp.eq.s32.totalorder %s14, 0
      %p118 = por %p116, %p117
      %p119 = scmp.ne.s32.totalorder %s111, %s113
      %p120 = scmp.eq.s32.totalorder %s19, 1
      %p121 = por %p119, %p120
      %p122 = scmp.ne.s32.totalorder %s113, %s114
      %p123 = scmp.eq.s32.totalorder %s19, 0
      %p124 = por %p122, %p123
      %p125 = scmp.ne.s32.totalorder %s113, %s114
      %p126 = scmp.eq.s32.totalorder %s20, 1
      %p127 = por %p125, %p126
      %p129 = scmp.ne.s32.totalorder %s114, %s128
      %p130 = scmp.eq.s32.totalorder %s20, 0
      %p131 = por %p129, %p130
      %s132 = ssub.s32 %s14, %s21
      %p133 = scmp.eq.s32.totalorder %s132, 0
      %s135 = sadd.s32 %s134, 1
      %s136 = scalar_select %p133, %s134, %s135
      %p139 = pneg %p133
      %p140 = scmp.eq.s32.totalorder %s14, 1
      %p141 = por %p139, %p140
      %p142 = scmp.ne.s32.totalorder %s134, %s137
      %p143 = scmp.eq.s32.totalorder %s14, 0
      %p144 = por %p142, %p143
      %p145 = scmp.ne.s32.totalorder %s134, %s137
      %p146 = scmp.eq.s32.totalorder %s19, 1
      %p147 = por %p145, %p146
      %p148 = scmp.ne.s32.totalorder %s137, %s138
      %p149 = scmp.eq.s32.totalorder %s19, 0
      %p150 = por %p148, %p149
      %p151 = scmp.ne.s32.totalorder %s137, %s138
      %p152 = scmp.eq.s32.totalorder %s20, 1
      %p153 = por %p151, %p152
      %p155 = scmp.ne.s32.totalorder %s138, %s154
      %p156 = scmp.eq.s32.totalorder %s20, 0
      %p157 = por %p155, %p156
      %p158 = scmp.le.s32.totalorder 1, %s14
      %p159 = scmp.lt.s32.totalorder %s14, 3
      %p160 = pnand %p158, %p159
      %p161 = pneg %p160
      // Predicated region
      $region9: #{tpu_custom_call.1} parent=5 // pred_check
        _
      $region10: #{tpu_custom_call.1} parent=5 // pred_check_branch
        %163 = sbr.rel (%p160) target = $region12
      $region11: #{tpu_custom_call.1} parent=5 // pred_region
        %s164 = ssub.s32 %s14, 1
        // Predicated region
        $region13: #{tpu_custom_call.1} parent=11 // pred_check
          %p165 = pneg %p61
        $region14: #{tpu_custom_call.1} parent=11 // pred_check_branch
          %167 = sbr.rel (%p165) target = $region16
        $region15: #{tpu_custom_call.1} parent=11 // pred_region
          _
        $region16: #{tpu_custom_call.1} parent=11 // pred_fallthru
          _
        // Predicated region
        $region17: #{tpu_custom_call.1} parent=11 // pred_check
          %p168 = pneg %p82
        $region18: #{tpu_custom_call.1} parent=11 // pred_check_branch
          %170 = sbr.rel (%p168) target = $region20
        $region19: #{tpu_custom_call.1} parent=11 // pred_region
          _
        $region20: #{tpu_custom_call.1} parent=11 // pred_fallthru
          _
        // Predicated region
        $region21: #{tpu_custom_call.1} parent=11 // pred_check
          %p171 = pneg %p103
        $region22: #{tpu_custom_call.1} parent=11 // pred_check_branch
          %173 = sbr.rel (%p171) target = $region24
        $region23: #{tpu_custom_call.1} parent=11 // pred_region
          _
        $region24: #{tpu_custom_call.1} parent=11 // pred_fallthru
          _
        // Predicated region
        $region25: #{tpu_custom_call.1} parent=11 // pred_check
          %p174 = pneg %p124
        $region26: #{tpu_custom_call.1} parent=11 // pred_check_branch
          %176 = sbr.rel (%p174) target = $region28
        $region27: #{tpu_custom_call.1} parent=11 // pred_region
          _
        $region28: #{tpu_custom_call.1} parent=11 // pred_fallthru
          _
      $region12: #{tpu_custom_call.1} parent=5 // pred_fallthru
        _
      %p177 = scmp.lt.s32.totalorder %s14, 2
      // Predicated region
      $region29: #{tpu_custom_call.1} parent=5 // pred_check
        %p178 = pneg %p177
      $region30: #{tpu_custom_call.1} parent=5 // pred_check_branch
        %180 = sbr.rel (%p178) target = $region32
      $region31: #{tpu_custom_call.1} parent=5 // pred_region
        // Predicated region
        $region33: #{tpu_custom_call.1} parent=31 // pred_check
          %p181 = pneg %p34
        $region34: #{tpu_custom_call.1} parent=31 // pred_check_branch
          %183 = sbr.rel (%p181) target = $region36
        $region35: #{tpu_custom_call.1} parent=31 // pred_region
          %s184 = smul.u32 32, %s14
          %p185 = scmp.lt.s32.totalorder %s184, 63
          %s186 = scalar_select %p185, %s184, 63
          %s187 = smul.addr %s186, 4
          %s188 = scalar_lea.vmem %s0, %s187
          %s189 = smul.u32 32, %s14
        $region36: #{tpu_custom_call.1} parent=31 // pred_fallthru
          _
      $region32: #{tpu_custom_call.1} parent=5 // pred_fallthru
        _
      %p190 = scmp.le.s32.totalorder 1, %s14
      %p191 = scmp.lt.s32.totalorder %s14, 3
      %p192 = pnand %p190, %p191
      %p193 = pneg %p192
      // Predicated region
      $region37: #{tpu_custom_call.1} parent=5 // pred_check
        _
      $region38: #{tpu_custom_call.1} parent=5 // pred_check_branch
        %195 = sbr.rel (%p192) target = $region40
      $region39: #{tpu_custom_call.1} parent=5 // pred_region
        %s196 = ssub.s32 %s14, 1
        %s197 = smul.u32 32, %s19
        %p198 = scmp.lt.s32.totalorder %s197, 63
        %s199 = scalar_select %p198, %s197, 63
        %s200 = smul.addr %s199, 4
        %s201 = scalar_lea.vmem %s0, %s200
        %p202 = pneg %p40
        %p203 = pneg %p37
        %p204 = pneg %p61
        %p205 = pneg %p58
        %p206 = pneg %p82
        %p207 = pneg %p79
        %p208 = pneg %p103
        %p209 = pneg %p100
        %p210 = pneg %p124
        %p211 = pneg %p121
        %p212 = pneg %p150
        %p213 = pneg %p147
        %s214 = sand.u32 %s137, 1
        %s215 = scalar_lea.sflag [#allocation3], %s214
        %s216 = sand.u32 %s137, 1
        %s217 = smul.addr %s216, 2
        %s218 = scalar_lea.vmem [#allocation2], %s217
        %s219 = smul.u32 32, %s19
        %p220 = scmp.lt.s32.totalorder %s219, 63
        %s221 = scalar_select %p220, %s219, 63
        %s222 = smul.addr %s221, 4
        %s223 = scalar_lea.vmem %s0, %s222
        %s224 = smul.u32 32, %s19
        %s225 = smul.u32 2, %s19
        %v227 = vld [vmem:[%s223] sm:$0xf]
        %v228 = vld [vmem:[%s223 + $0x4] sm:$0xf]
        %v229 = vld [vmem:[%s223 + $0x8] sm:$0xf]
        %v230 = vld [vmem:[%s223 + $0xc] sm:$0xf]
        %v231 = vld [vmem:[%s223 + $0x10] sm:$0xf]
        %v232 = vld [vmem:[%s223 + $0x14] sm:$0xf]
        %v233 = vld [vmem:[%s223 + $0x18] sm:$0xf]
        %v234 = vld [vmem:[%s223 + $0x1c] sm:$0xf]
        %v235 = vld [vmem:[%s223 + $0x20] sm:$0xf]
        %v236 = vld [vmem:[%s223 + $0x24] sm:$0xf]
        %v237 = vld [vmem:[%s223 + $0x28] sm:$0xf]
        %v238 = vld [vmem:[%s223 + $0x2c] sm:$0xf]
        %v239 = vld [vmem:[%s223 + $0x30] sm:$0xf]
        %v240 = vld [vmem:[%s223 + $0x34] sm:$0xf]
        %v241 = vld [vmem:[%s223 + $0x38] sm:$0xf]
        %v242 = vld [vmem:[%s223 + $0x3c] sm:$0xf]
        %v243 = vld [vmem:[%s223 + $0x40] sm:$0xf]
        %v244 = vld [vmem:[%s223 + $0x44] sm:$0xf]
        %v245 = vld [vmem:[%s223 + $0x48] sm:$0xf]
        %v246 = vld [vmem:[%s223 + $0x4c] sm:$0xf]
        %v247 = vld [vmem:[%s223 + $0x50] sm:$0xf]
        %v248 = vld [vmem:[%s223 + $0x54] sm:$0xf]
        %v249 = vld [vmem:[%s223 + $0x58] sm:$0xf]
        %v250 = vld [vmem:[%s223 + $0x5c] sm:$0xf]
        %v251 = vld [vmem:[%s223 + $0x60] sm:$0xf]
        %v252 = vld [vmem:[%s223 + $0x64] sm:$0xf]
        %v253 = vld [vmem:[%s223 + $0x68] sm:$0xf]
        %v254 = vld [vmem:[%s223 + $0x6c] sm:$0xf]
        %v255 = vld [vmem:[%s223 + $0x70] sm:$0xf]
        %v256 = vld [vmem:[%s223 + $0x74] sm:$0xf]
        %v257 = vld [vmem:[%s223 + $0x78] sm:$0xf]
        %v258 = vld [vmem:[%s223 + $0x7c] sm:$0xf]
        %v259 = vld [vmem:[%s4] sm:$0x1]
        %v260 = vld [vmem:[%s4 + $0x1] sm:$0x1]
        %v261 = vld [vmem:[%s4 + $0x2] sm:$0x1]
        %v262 = vld [vmem:[%s4 + $0x3] sm:$0x1]
        %v263 = vld [vmem:[%s4 + $0x4] sm:$0x1]
        %v264 = vld [vmem:[%s1] sm:$0xf]
        %v265 = vlaneseq
        %v266 = vshrl.u32 %v265, 7
        %v267 = vsub.s32 0, %v266
        %v268 = vrot.slane %v259, %v267
        %v301 = vunpack.c.l.b16 %v227
        %v302 = vunpack.c.l.b16 %v228
        %v303 = vunpack.c.l.b16 %v229
        %v304 = vunpack.c.l.b16 %v230
        %v305 = vunpack.c.l.b16 %v231
        %v306 = vunpack.c.l.b16 %v232
        %v307 = vunpack.c.l.b16 %v233
        %v308 = vunpack.c.l.b16 %v234
        %v309 = vunpack.c.l.b16 %v235
        %v310 = vunpack.c.l.b16 %v236
        %v311 = vunpack.c.l.b16 %v237
        %v312 = vunpack.c.l.b16 %v238
        %v313 = vunpack.c.l.b16 %v239
        %v314 = vunpack.c.l.b16 %v240
        %v315 = vunpack.c.l.b16 %v241
        %v316 = vunpack.c.l.b16 %v242
        %v317 = vunpack.c.l.b16 %v243
        %v318 = vunpack.c.l.b16 %v244
        %v319 = vunpack.c.l.b16 %v245
        %v320 = vunpack.c.l.b16 %v246
        %v321 = vunpack.c.l.b16 %v247
        %v322 = vunpack.c.l.b16 %v248
        %v323 = vunpack.c.l.b16 %v249
        %v324 = vunpack.c.l.b16 %v250
        %v325 = vunpack.c.l.b16 %v251
        %v326 = vunpack.c.l.b16 %v252
        %v327 = vunpack.c.l.b16 %v253
        %v328 = vunpack.c.l.b16 %v254
        %v329 = vunpack.c.l.b16 %v255
        %v330 = vunpack.c.l.b16 %v256
        %v331 = vunpack.c.l.b16 %v257
        %v332 = vunpack.c.l.b16 %v258
        %v333 = vpack.c.b16 %v302, %v301
        %v334 = vpack.c.b16 %v304, %v303
        %v335 = vpack.c.b16 %v306, %v305
        %v336 = vpack.c.b16 %v308, %v307
        %v337 = vpack.c.b16 %v310, %v309
        %v338 = vpack.c.b16 %v312, %v311
        %v339 = vpack.c.b16 %v314, %v313
        %v340 = vpack.c.b16 %v316, %v315
        %v341 = vpack.c.b16 %v318, %v317
        %v342 = vpack.c.b16 %v320, %v319
        %v343 = vpack.c.b16 %v322, %v321
        %v344 = vpack.c.b16 %v324, %v323
        %v345 = vpack.c.b16 %v326, %v325
        %v346 = vpack.c.b16 %v328, %v327
        %v347 = vpack.c.b16 %v330, %v329
        %v348 = vpack.c.b16 %v332, %v331
        %vm349 = vcmask 64512
        %v351 = vsel %vm349, %v333, 0
        %v354 = vsel %vm349, %v334, 0
        %v357 = vsel %vm349, %v335, 0
        %v360 = vsel %vm349, %v336, 0
        %v363 = vsel %vm349, %v337, 0
        %v366 = vsel %vm349, %v338, 0
        %v369 = vsel %vm349, %v339, 0
        %v372 = vsel %vm349, %v340, 0
        %v375 = vsel %vm349, %v341, 0
        %v378 = vsel %vm349, %v342, 0
        %v381 = vsel %vm349, %v343, 0
        %v384 = vsel %vm349, %v344, 0
        %v387 = vsel %vm349, %v345, 0
        %v390 = vsel %vm349, %v346, 0
        %v393 = vsel %vm349, %v347, 0
        %v396 = vsel %vm349, %v348, 0
        %vm398 = vcmask 1043456
        %v400 = vsel %vm398, %v264, 0
        %402 = vmatprep.subr.bf16.mxu0 0
        %403 = vmatpush1.bf16.msra.mxu0 %v400
        %404 = vmatprep.subr.bf16.mxu0 0
        %405 = vmatpush1.bf16.msra.mxu0 0
        %406 = vmatprep.subr.bf16.mxu0 0
        %407 = vmatpush1.bf16.msra.mxu0 0
        %408 = vmatprep.subr.bf16.mxu0 0
        %409 = vmatpush1.bf16.msra.mxu0 0
        %410 = vmatprep.subr.bf16.mxu0 0
        %411 = vmatpush1.bf16.msra.mxu0 0
        %412 = vmatprep.subr.bf16.mxu0 0
        %413 = vmatpush1.bf16.msra.mxu0 0
        %414 = vmatprep.subr.bf16.mxu0 0
        %415 = vmatpush1.bf16.msra.mxu0 0
        %416 = vmatprep.subr.bf16.mxu0 0
        %417 = vmatpush1.bf16.msra.mxu0 0
        %418 = vmatprep.subr.bf16.mxu0 0
        %419 = vmatpush1.bf16.msra.mxu0 0
        %420 = vmatprep.subr.bf16.mxu0 0
        %421 = vmatpush1.bf16.msra.mxu0 0
        %422 = vmatprep.subr.bf16.mxu0 0
        %423 = vmatpush1.bf16.msra.mxu0 0
        %424 = vmatprep.subr.bf16.mxu0 0
        %425 = vmatpush1.bf16.msra.mxu0 0
        %426 = vmatprep.subr.bf16.mxu0 0
        %427 = vmatpush1.bf16.msra.mxu0 0
        %428 = vmatprep.subr.bf16.mxu0 0
        %429 = vmatpush1.bf16.msra.mxu0 0
        %430 = vmatprep.subr.bf16.mxu0 0
        %431 = vmatpush1.bf16.msra.mxu0 0
        %432 = vmatprep.subr.bf16.mxu0 0
        %433 = vmatpush1.bf16.msra.mxu0 0
        %434 = vmatprep.mubr.bf16.mxu0 0
        %435 = vmatmul.mubr.bf16.gmra.mrb[0].mxu0 %v351
        %v436 = vpop.f32.mrb[0].mxu0
        %v437 = vadd.f32 %v268, %v436
        %v438 = vpop.f32.mrb[0].mxu0
        %v439 = vpop.f32.mrb[0].mxu0
        %v440 = vadd.f32 %v268, %v439
        %v441 = vpop.f32.mrb[0].mxu0
        %442 = vmatprep.mubr.bf16.mxu0 0
        %443 = vmatmul.mubr.bf16.gmra.mrb[0].mxu0 %v354
        %v444 = vpop.f32.mrb[0].mxu0
        %v445 = vadd.f32 %v268, %v444
        %v446 = vpop.f32.mrb[0].mxu0
        %v447 = vpop.f32.mrb[0].mxu0
        %v448 = vadd.f32 %v268, %v447
        %v449 = vpop.f32.mrb[0].mxu0
        %450 = vmatprep.mubr.bf16.mxu0 0
        %451 = vmatmul.mubr.bf16.gmra.mrb[0].mxu0 %v357
        %v452 = vpop.f32.mrb[0].mxu0
        %v453 = vadd.f32 %v268, %v452
        %v454 = vpop.f32.mrb[0].mxu0
        %v455 = vpop.f32.mrb[0].mxu0
        %v456 = vadd.f32 %v268, %v455
        %v457 = vpop.f32.mrb[0].mxu0
        %458 = vmatprep.mubr.bf16.mxu0 0
        %459 = vmatmul.mubr.bf16.gmra.mrb[0].mxu0 %v360
        %v460 = vpop.f32.mrb[0].mxu0
        %v461 = vadd.f32 %v268, %v460
        %v462 = vpop.f32.mrb[0].mxu0
        %v463 = vpop.f32.mrb[0].mxu0
        %v464 = vadd.f32 %v268, %v463
        %v465 = vpop.f32.mrb[0].mxu0
        %466 = vmatprep.mubr.bf16.mxu0 0
        %467 = vmatmul.mubr.bf16.gmra.mrb[0].mxu0 %v363
        %v468 = vpop.f32.mrb[0].mxu0
        %v469 = vadd.f32 %v268, %v468
        %v470 = vpop.f32.mrb[0].mxu0
        %v471 = vpop.f32.mrb[0].mxu0
        %v472 = vadd.f32 %v268, %v471
        %v473 = vpop.f32.mrb[0].mxu0
        %474 = vmatprep.mubr.bf16.mxu0 0
        %475 = vmatmul.mubr.bf16.gmra.mrb[0].mxu0 %v366
        %v476 = vpop.f32.mrb[0].mxu0
        %v477 = vadd.f32 %v268, %v476
        %v478 = vpop.f32.mrb[0].mxu0
        %v479 = vpop.f32.mrb[0].mxu0
        %v480 = vadd.f32 %v268, %v479
        %v481 = vpop.f32.mrb[0].mxu0
        %482 = vmatprep.mubr.bf16.mxu0 0
        %483 = vmatmul.mubr.bf16.gmra.mrb[0].mxu0 %v369
        %v484 = vpop.f32.mrb[0].mxu0
        %v485 = vadd.f32 %v268, %v484
        %v486 = vpop.f32.mrb[0].mxu0
        %v487 = vpop.f32.mrb[0].mxu0
        %v488 = vadd.f32 %v268, %v487
        %v489 = vpop.f32.mrb[0].mxu0
        %490 = vmatprep.mubr.bf16.mxu0 0
        %491 = vmatmul.mubr.bf16.gmra.mrb[0].mxu0 %v372
        %v492 = vpop.f32.mrb[0].mxu0
        %v493 = vadd.f32 %v268, %v492
        %v494 = vpop.f32.mrb[0].mxu0
        %v495 = vpop.f32.mrb[0].mxu0
        %v496 = vadd.f32 %v268, %v495
        %v497 = vpop.f32.mrb[0].mxu0
        %498 = vmatprep.mubr.bf16.mxu0 0
        %499 = vmatmul.mubr.bf16.gmra.mrb[0].mxu0 %v375
        %v500 = vpop.f32.mrb[0].mxu0
        %v501 = vadd.f32 %v268, %v500
        %v502 = vpop.f32.mrb[0].mxu0
        %v503 = vpop.f32.mrb[0].mxu0
        %v504 = vadd.f32 %v268, %v503
        %v505 = vpop.f32.mrb[0].mxu0
        %506 = vmatprep.mubr.bf16.mxu0 0
        %507 = vmatmul.mubr.bf16.gmra.mrb[0].mxu0 %v378
        %v508 = vpop.f32.mrb[0].mxu0
        %v509 = vadd.f32 %v268, %v508
        %v510 = vpop.f32.mrb[0].mxu0
        %v511 = vpop.f32.mrb[0].mxu0
        %v512 = vadd.f32 %v268, %v511
        %v513 = vpop.f32.mrb[0].mxu0
        %514 = vmatprep.mubr.bf16.mxu0 0
        %515 = vmatmul.mubr.bf16.gmra.mrb[0].mxu0 %v381
        %v516 = vpop.f32.mrb[0].mxu0
        %v517 = vadd.f32 %v268, %v516
        %v518 = vpop.f32.mrb[0].mxu0
        %v519 = vpop.f32.mrb[0].mxu0
        %v520 = vadd.f32 %v268, %v519
        %v521 = vpop.f32.mrb[0].mxu0
        %522 = vmatprep.mubr.bf16.mxu0 0
        %523 = vmatmul.mubr.bf16.gmra.mrb[0].mxu0 %v384
        %v524 = vpop.f32.mrb[0].mxu0
        %v525 = vadd.f32 %v268, %v524
        %v526 = vpop.f32.mrb[0].mxu0
        %v527 = vpop.f32.mrb[0].mxu0
        %v528 = vadd.f32 %v268, %v527
        %v529 = vpop.f32.mrb[0].mxu0
        %530 = vmatprep.mubr.bf16.mxu0 0
        %531 = vmatmul.mubr.bf16.gmra.mrb[0].mxu0 %v387
        %v532 = vpop.f32.mrb[0].mxu0
        %v533 = vadd.f32 %v268, %v532
        %v534 = vpop.f32.mrb[0].mxu0
        %v535 = vpop.f32.mrb[0].mxu0
        %v536 = vadd.f32 %v268, %v535
        %v537 = vpop.f32.mrb[0].mxu0
        %538 = vmatprep.mubr.bf16.mxu0 0
        %539 = vmatmul.mubr.bf16.gmra.mrb[0].mxu0 %v390
        %v540 = vpop.f32.mrb[0].mxu0
        %v541 = vadd.f32 %v268, %v540
        %v542 = vpop.f32.mrb[0].mxu0
        %v543 = vpop.f32.mrb[0].mxu0
        %v544 = vadd.f32 %v268, %v543
        %v545 = vpop.f32.mrb[0].mxu0
        %546 = vmatprep.mubr.bf16.mxu0 0
        %547 = vmatmul.mubr.bf16.gmra.mrb[0].mxu0 %v393
        %v548 = vpop.f32.mrb[0].mxu0
        %v549 = vadd.f32 %v268, %v548
        %v550 = vpop.f32.mrb[0].mxu0
        %v551 = vpop.f32.mrb[0].mxu0
        %v552 = vadd.f32 %v268, %v551
        %v553 = vpop.f32.mrb[0].mxu0
        %554 = vmatprep.mubr.bf16.mxu0 0
        %555 = vmatmul.mubr.bf16.gmra.mrb[0].mxu0 %v396
        %v556 = vpop.f32.mrb[0].mxu0
        %v557 = vadd.f32 %v268, %v556
        %v558 = vpop.f32.mrb[0].mxu0
        %v559 = vpop.f32.mrb[0].mxu0
        %v560 = vadd.f32 %v268, %v559
        %v561 = vpop.f32.mrb[0].mxu0
        %562 = vdwg.mxu0
        %v563 = vmax.f32 %v437, 0.0
        %v564 = vmax.f32 %v440, 0.0
        %v565 = vmax.f32 %v445, 0.0
        %v566 = vmax.f32 %v448, 0.0
        %v567 = vmax.f32 %v453, 0.0
        %v568 = vmax.f32 %v456, 0.0
        %v569 = vmax.f32 %v461, 0.0
        %v570 = vmax.f32 %v464, 0.0
        %v571 = vmax.f32 %v469, 0.0
        %v572 = vmax.f32 %v472, 0.0
        %v573 = vmax.f32 %v477, 0.0
        %v574 = vmax.f32 %v480, 0.0
        %v575 = vmax.f32 %v485, 0.0
        %v576 = vmax.f32 %v488, 0.0
        %v577 = vmax.f32 %v493, 0.0
        %v578 = vmax.f32 %v496, 0.0
        %v579 = vmax.f32 %v501, 0.0
        %v580 = vmax.f32 %v504, 0.0
        %v581 = vmax.f32 %v509, 0.0
        %v582 = vmax.f32 %v512, 0.0
        %v583 = vmax.f32 %v517, 0.0
        %v584 = vmax.f32 %v520, 0.0
        %v585 = vmax.f32 %v525, 0.0
        %v586 = vmax.f32 %v528, 0.0
        %v587 = vmax.f32 %v533, 0.0
        %v588 = vmax.f32 %v536, 0.0
        %v589 = vmax.f32 %v541, 0.0
        %v590 = vmax.f32 %v544, 0.0
        %v591 = vmax.f32 %v549, 0.0
        %v592 = vmax.f32 %v552, 0.0
        %v593 = vmax.f32 %v557, 0.0
        %v594 = vmax.f32 %v560, 0.0
        %v595 = vpack.c.bf16 %v564, %v563
        %v596 = vpack.c.bf16 %v566, %v565
        %v597 = vpack.c.bf16 %v568, %v567
        %v598 = vpack.c.bf16 %v570, %v569
        %v599 = vpack.c.bf16 %v572, %v571
        %v600 = vpack.c.bf16 %v574, %v573
        %v601 = vpack.c.bf16 %v576, %v575
        %v602 = vpack.c.bf16 %v578, %v577
        %v603 = vpack.c.bf16 %v580, %v579
        %v604 = vpack.c.bf16 %v582, %v581
        %v605 = vpack.c.bf16 %v584, %v583
        %v606 = vpack.c.bf16 %v586, %v585
        %v607 = vpack.c.bf16 %v588, %v587
        %v608 = vpack.c.bf16 %v590, %v589
        %v609 = vpack.c.bf16 %v592, %v591
        %v610 = vpack.c.bf16 %v594, %v593
        %v611 = vld [vmem:[%s2] sm:$0xf]
        %v612 = vld [vmem:[%s2 + $0x4] sm:$0xf]
        %v613 = vld [vmem:[%s2 + $0x8] sm:$0xf]
        %v614 = vld [vmem:[%s2 + $0xc] sm:$0xf]
        %v615 = vld [vmem:[%s2 + $0x10] sm:$0xf]
        %v616 = vld [vmem:[%s2 + $0x14] sm:$0xf]
        %v617 = vld [vmem:[%s2 + $0x18] sm:$0xf]
        %v618 = vld [vmem:[%s2 + $0x1c] sm:$0xf]
        %v619 = vld [vmem:[%s2 + $0x20] sm:$0xf]
        %v620 = vld [vmem:[%s2 + $0x24] sm:$0xf]
        %v621 = vld [vmem:[%s2 + $0x28] sm:$0xf]
        %v622 = vld [vmem:[%s2 + $0x2c] sm:$0xf]
        %v623 = vld [vmem:[%s2 + $0x30] sm:$0xf]
        %v624 = vld [vmem:[%s2 + $0x34] sm:$0xf]
        %v625 = vld [vmem:[%s2 + $0x38] sm:$0xf]
        %v626 = vld [vmem:[%s2 + $0x3c] sm:$0xf]
        %v627 = vlaneseq
        %v628 = vshrl.u32 %v627, 7
        %v629 = vsub.s32 0, %v628
        %v630 = vrot.slane %v260, %v629
        %v647 = vunpack.c.l.b16 %v611
        %v648 = vunpack.c.l.b16 %v612
        %v649 = vunpack.c.l.b16 %v613
        %v650 = vunpack.c.l.b16 %v614
        %v651 = vunpack.c.l.b16 %v615
        %v652 = vunpack.c.l.b16 %v616
        %v653 = vunpack.c.l.b16 %v617
        %v654 = vunpack.c.l.b16 %v618
        %v655 = vunpack.c.l.b16 %v619
        %v656 = vunpack.c.l.b16 %v620
        %v657 = vunpack.c.l.b16 %v621
        %v658 = vunpack.c.l.b16 %v622
        %v659 = vunpack.c.l.b16 %v623
        %v660 = vunpack.c.l.b16 %v624
        %v661 = vunpack.c.l.b16 %v625
        %v662 = vunpack.c.l.b16 %v626
        %v663 = vpack.c.b16 %v648, %v647
        %v664 = vpack.c.b16 %v650, %v649
        %v665 = vpack.c.b16 %v652, %v651
        %v666 = vpack.c.b16 %v654, %v653
        %v667 = vpack.c.b16 %v656, %v655
        %v668 = vpack.c.b16 %v658, %v657
        %v669 = vpack.c.b16 %v660, %v659
        %v670 = vpack.c.b16 %v662, %v661
        %679 = vmatprep.subr.bf16.mxu0 0
        %680 = vmatpush1.bf16.msra.mxu0 %v663
        %681 = vmatprep.subr.bf16.mxu0 0
        %682 = vmatpush1.bf16.msra.mxu0 %v664
        %683 = vmatprep.subr.bf16.mxu0 0
        %684 = vmatpush1.bf16.msra.mxu0 %v665
        %685 = vmatprep.subr.bf16.mxu0 0
        %686 = vmatpush1.bf16.msra.mxu0 %v666
        %687 = vmatprep.subr.bf16.mxu0 0
        %688 = vmatpush1.bf16.msra.mxu0 %v667
        %689 = vmatprep.subr.bf16.mxu0 0
        %690 = vmatpush1.bf16.msra.mxu0 %v668
        %691 = vmatprep.subr.bf16.mxu0 0
        %692 = vmatpush1.bf16.msra.mxu0 %v669
        %693 = vmatprep.subr.bf16.mxu0 0
        %694 = vmatpush1.bf16.msra.mxu0 %v670
        %695 = vmatprep.subr.bf16.mxu0 0
        %696 = vmatpush1.bf16.msra.mxu0 0
        %697 = vmatprep.subr.bf16.mxu0 0
        %698 = vmatpush1.bf16.msra.mxu0 0
        %699 = vmatprep.subr.bf16.mxu0 0
        %700 = vmatpush1.bf16.msra.mxu0 0
        %701 = vmatprep.subr.bf16.mxu0 0
        %702 = vmatpush1.bf16.msra.mxu0 0
        %703 = vmatprep.subr.bf16.mxu0 0
        %704 = vmatpush1.bf16.msra.mxu0 0
        %705 = vmatprep.subr.bf16.mxu0 0
        %706 = vmatpush1.bf16.msra.mxu0 0
        %707 = vmatprep.subr.bf16.mxu0 0
        %708 = vmatpush1.bf16.msra.mxu0 0
        %709 = vmatprep.subr.bf16.mxu0 0
        %710 = vmatpush1.bf16.msra.mxu0 0
        %711 = vmatprep.mubr.bf16.mxu0 0
        %712 = vmatmul.mubr.bf16.gmra.mrb[0].mxu0 %v595
        %v713 = vpop.f32.mrb[0].mxu0
        %v714 = vadd.f32 %v630, %v713
        %v715 = vpop.f32.mrb[0].mxu0
        %v716 = vpop.f32.mrb[0].mxu0
        %v717 = vadd.f32 %v630, %v716
        %v718 = vpop.f32.mrb[0].mxu0
        %719 = vmatprep.mubr.bf16.mxu0 0
        %720 = vmatmul.mubr.bf16.gmra.mrb[0].mxu0 %v596
        %v721 = vpop.f32.mrb[0].mxu0
        %v722 = vadd.f32 %v630, %v721
        %v723 = vpop.f32.mrb[0].mxu0
        %v724 = vpop.f32.mrb[0].mxu0
        %v725 = vadd.f32 %v630, %v724
        %v726 = vpop.f32.mrb[0].mxu0
        %727 = vmatprep.mubr.bf16.mxu0 0
        %728 = vmatmul.mubr.bf16.gmra.mrb[0].mxu0 %v597
        %v729 = vpop.f32.mrb[0].mxu0
        %v730 = vadd.f32 %v630, %v729
        %v731 = vpop.f32.mrb[0].mxu0
        %v732 = vpop.f32.mrb[0].mxu0
        %v733 = vadd.f32 %v630, %v732
        %v734 = vpop.f32.mrb[0].mxu0
        %735 = vmatprep.mubr.bf16.mxu0 0
        %736 = vmatmul.mubr.bf16.gmra.mrb[0].mxu0 %v598
        %v737 = vpop.f32.mrb[0].mxu0
        %v738 = vadd.f32 %v630, %v737
        %v739 = vpop.f32.mrb[0].mxu0
        %v740 = vpop.f32.mrb[0].mxu0
        %v741 = vadd.f32 %v630, %v740
        %v742 = vpop.f32.mrb[0].mxu0
        %743 = vmatprep.mubr.bf16.mxu0 0
        %744 = vmatmul.mubr.bf16.gmra.mrb[0].mxu0 %v599
        %v745 = vpop.f32.mrb[0].mxu0
        %v746 = vadd.f32 %v630, %v745
        %v747 = vpop.f32.mrb[0].mxu0
        %v748 = vpop.f32.mrb[0].mxu0
        %v749 = vadd.f32 %v630, %v748
        %v750 = vpop.f32.mrb[0].mxu0
        %751 = vmatprep.mubr.bf16.mxu0 0
        %752 = vmatmul.mubr.bf16.gmra.mrb[0].mxu0 %v600
        %v753 = vpop.f32.mrb[0].mxu0
        %v754 = vadd.f32 %v630, %v753
        %v755 = vpop.f32.mrb[0].mxu0
        %v756 = vpop.f32.mrb[0].mxu0
        %v757 = vadd.f32 %v630, %v756
        %v758 = vpop.f32.mrb[0].mxu0
        %759 = vmatprep.mubr.bf16.mxu0 0
        %760 = vmatmul.mubr.bf16.gmra.mrb[0].mxu0 %v601
        %v761 = vpop.f32.mrb[0].mxu0
        %v762 = vadd.f32 %v630, %v761
        %v763 = vpop.f32.mrb[0].mxu0
        %v764 = vpop.f32.mrb[0].mxu0
        %v765 = vadd.f32 %v630, %v764
        %v766 = vpop.f32.mrb[0].mxu0
        %767 = vmatprep.mubr.bf16.mxu0 0
        %768 = vmatmul.mubr.bf16.gmra.mrb[0].mxu0 %v602
        %v769 = vpop.f32.mrb[0].mxu0
        %v770 = vadd.f32 %v630, %v769
        %v771 = vpop.f32.mrb[0].mxu0
        %v772 = vpop.f32.mrb[0].mxu0
        %v773 = vadd.f32 %v630, %v772
        %v774 = vpop.f32.mrb[0].mxu0
        %775 = vmatprep.mubr.bf16.mxu0 0
        %776 = vmatmul.mubr.bf16.gmra.mrb[0].mxu0 %v603
        %v777 = vpop.f32.mrb[0].mxu0
        %v778 = vadd.f32 %v630, %v777
        %v779 = vpop.f32.mrb[0].mxu0
        %v780 = vpop.f32.mrb[0].mxu0
        %v781 = vadd.f32 %v630, %v780
        %v782 = vpop.f32.mrb[0].mxu0
        %783 = vmatprep.mubr.bf16.mxu0 0
        %784 = vmatmul.mubr.bf16.gmra.mrb[0].mxu0 %v604
        %v785 = vpop.f32.mrb[0].mxu0
        %v786 = vadd.f32 %v630, %v785
        %v787 = vpop.f32.mrb[0].mxu0
        %v788 = vpop.f32.mrb[0].mxu0
        %v789 = vadd.f32 %v630, %v788
        %v790 = vpop.f32.mrb[0].mxu0
        %791 = vmatprep.mubr.bf16.mxu0 0
        %792 = vmatmul.mubr.bf16.gmra.mrb[0].mxu0 %v605
        %v793 = vpop.f32.mrb[0].mxu0
        %v794 = vadd.f32 %v630, %v793
        %v795 = vpop.f32.mrb[0].mxu0
        %v796 = vpop.f32.mrb[0].mxu0
        %v797 = vadd.f32 %v630, %v796
        %v798 = vpop.f32.mrb[0].mxu0
        %799 = vmatprep.mubr.bf16.mxu0 0
        %800 = vmatmul.mubr.bf16.gmra.mrb[0].mxu0 %v606
        %v801 = vpop.f32.mrb[0].mxu0
        %v802 = vadd.f32 %v630, %v801
        %v803 = vpop.f32.mrb[0].mxu0
        %v804 = vpop.f32.mrb[0].mxu0
        %v805 = vadd.f32 %v630, %v804
        %v806 = vpop.f32.mrb[0].mxu0
        %807 = vmatprep.mubr.bf16.mxu0 0
        %808 = vmatmul.mubr.bf16.gmra.mrb[0].mxu0 %v607
        %v809 = vpop.f32.mrb[0].mxu0
        %v810 = vadd.f32 %v630, %v809
        %v811 = vpop.f32.mrb[0].mxu0
        %v812 = vpop.f32.mrb[0].mxu0
        %v813 = vadd.f32 %v630, %v812
        %v814 = vpop.f32.mrb[0].mxu0
        %815 = vmatprep.mubr.bf16.mxu0 0
        %816 = vmatmul.mubr.bf16.gmra.mrb[0].mxu0 %v608
        %v817 = vpop.f32.mrb[0].mxu0
        %v818 = vadd.f32 %v630, %v817
        %v819 = vpop.f32.mrb[0].mxu0
        %v820 = vpop.f32.mrb[0].mxu0
        %v821 = vadd.f32 %v630, %v820
        %v822 = vpop.f32.mrb[0].mxu0
        %823 = vmatprep.mubr.bf16.mxu0 0
        %824 = vmatmul.mubr.bf16.gmra.mrb[0].mxu0 %v609
        %v825 = vpop.f32.mrb[0].mxu0
        %v826 = vadd.f32 %v630, %v825
        %v827 = vpop.f32.mrb[0].mxu0
        %v828 = vpop.f32.mrb[0].mxu0
        %v829 = vadd.f32 %v630, %v828
        %v830 = vpop.f32.mrb[0].mxu0
        %831 = vmatprep.mubr.bf16.mxu0 0
        %832 = vmatmul.mubr.bf16.gmra.mrb[0].mxu0 %v610
        %v833 = vpop.f32.mrb[0].mxu0
        %v834 = vadd.f32 %v630, %v833
        %v835 = vpop.f32.mrb[0].mxu0
        %v836 = vpop.f32.mrb[0].mxu0
        %v837 = vadd.f32 %v630, %v836
        %v838 = vpop.f32.mrb[0].mxu0
        %839 = vdwg.mxu0
        %v840 = vmax.f32 %v714, 0.0
        %v841 = vmax.f32 %v717, 0.0
        %v842 = vmax.f32 %v722, 0.0
        %v843 = vmax.f32 %v725, 0.0
        %v844 = vmax.f32 %v730, 0.0
        %v845 = vmax.f32 %v733, 0.0
        %v846 = vmax.f32 %v738, 0.0
        %v847 = vmax.f32 %v741, 0.0
        %v848 = vmax.f32 %v746, 0.0
        %v849 = vmax.f32 %v749, 0.0
        %v850 = vmax.f32 %v754, 0.0
        %v851 = vmax.f32 %v757, 0.0
        %v852 = vmax.f32 %v762, 0.0
        %v853 = vmax.f32 %v765, 0.0
        %v854 = vmax.f32 %v770, 0.0
        %v855 = vmax.f32 %v773, 0.0
        %v856 = vmax.f32 %v778, 0.0
        %v857 = vmax.f32 %v781, 0.0
        %v858 = vmax.f32 %v786, 0.0
        %v859 = vmax.f32 %v789, 0.0
        %v860 = vmax.f32 %v794, 0.0
        %v861 = vmax.f32 %v797, 0.0
        %v862 = vmax.f32 %v802, 0.0
        %v863 = vmax.f32 %v805, 0.0
        %v864 = vmax.f32 %v810, 0.0
        %v865 = vmax.f32 %v813, 0.0
        %v866 = vmax.f32 %v818, 0.0
        %v867 = vmax.f32 %v821, 0.0
        %v868 = vmax.f32 %v826, 0.0
        %v869 = vmax.f32 %v829, 0.0
        %v870 = vmax.f32 %v834, 0.0
        %v871 = vmax.f32 %v837, 0.0
        %v872 = vpack.c.bf16 %v841, %v840
        %v873 = vpack.c.bf16 %v843, %v842
        %v874 = vpack.c.bf16 %v845, %v844
        %v875 = vpack.c.bf16 %v847, %v846
        %v876 = vpack.c.bf16 %v849, %v848
        %v877 = vpack.c.bf16 %v851, %v850
        %v878 = vpack.c.bf16 %v853, %v852
        %v879 = vpack.c.bf16 %v855, %v854
        %v880 = vpack.c.bf16 %v857, %v856
        %v881 = vpack.c.bf16 %v859, %v858
        %v882 = vpack.c.bf16 %v861, %v860
        %v883 = vpack.c.bf16 %v863, %v862
        %v884 = vpack.c.bf16 %v865, %v864
        %v885 = vpack.c.bf16 %v867, %v866
        %v886 = vpack.c.bf16 %v869, %v868
        %v887 = vpack.c.bf16 %v871, %v870
        %v888 = vld [vmem:[%s3] sm:$0xf]
        %v889 = vld [vmem:[%s3 + $0x4] sm:$0xf]
        %v890 = vld [vmem:[%s3 + $0x8] sm:$0xf]
        %v891 = vld [vmem:[%s3 + $0xc] sm:$0xf]
        %v892 = vld [vmem:[%s3 + $0x10] sm:$0xf]
        %v893 = vld [vmem:[%s3 + $0x14] sm:$0xf]
        %v894 = vld [vmem:[%s3 + $0x18] sm:$0xf]
        %v895 = vld [vmem:[%s3 + $0x1c] sm:$0xf]
        %v896 = vld [vmem:[%s3 + $0x20] sm:$0xf]
        %v897 = vld [vmem:[%s3 + $0x24] sm:$0xf]
        %v898 = vld [vmem:[%s3 + $0x28] sm:$0xf]
        %v899 = vld [vmem:[%s3 + $0x2c] sm:$0xf]
        %v900 = vld [vmem:[%s3 + $0x30] sm:$0xf]
        %v901 = vld [vmem:[%s3 + $0x34] sm:$0xf]
        %v902 = vld [vmem:[%s3 + $0x38] sm:$0xf]
        %v903 = vld [vmem:[%s3 + $0x3c] sm:$0xf]
        %v904 = vlaneseq
        %v905 = vshrl.u32 %v904, 7
        %v906 = vsub.s32 0, %v905
        %v907 = vrot.slane %v261, %v906
        %v924 = vunpack.c.l.b16 %v888
        %v925 = vunpack.c.l.b16 %v889
        %v926 = vunpack.c.l.b16 %v890
        %v927 = vunpack.c.l.b16 %v891
        %v928 = vunpack.c.l.b16 %v892
        %v929 = vunpack.c.l.b16 %v893
        %v930 = vunpack.c.l.b16 %v894
        %v931 = vunpack.c.l.b16 %v895
        %v932 = vunpack.c.l.b16 %v896
        %v933 = vunpack.c.l.b16 %v897
        %v934 = vunpack.c.l.b16 %v898
        %v935 = vunpack.c.l.b16 %v899
        %v936 = vunpack.c.l.b16 %v900
        %v937 = vunpack.c.l.b16 %v901
        %v938 = vunpack.c.l.b16 %v902
        %v939 = vunpack.c.l.b16 %v903
        %v940 = vpack.c.b16 %v925, %v924
        %v941 = vpack.c.b16 %v927, %v926
        %v942 = vpack.c.b16 %v929, %v928
        %v943 = vpack.c.b16 %v931, %v930
        %v944 = vpack.c.b16 %v933, %v932
        %v945 = vpack.c.b16 %v935, %v934
        %v946 = vpack.c.b16 %v937, %v936
        %v947 = vpack.c.b16 %v939, %v938
        %956 = vmatprep.subr.bf16.mxu0 0
        %957 = vmatpush1.bf16.msra.mxu0 %v940
        %958 = vmatprep.subr.bf16.mxu0 0
        %959 = vmatpush1.bf16.msra.mxu0 %v941
        %960 = vmatprep.subr.bf16.mxu0 0
        %961 = vmatpush1.bf16.msra.mxu0 %v942
        %962 = vmatprep.subr.bf16.mxu0 0
        %963 = vmatpush1.bf16.msra.mxu0 %v943
        %964 = vmatprep.subr.bf16.mxu0 0
        %965 = vmatpush1.bf16.msra.mxu0 %v944
        %966 = vmatprep.subr.bf16.mxu0 0
        %967 = vmatpush1.bf16.msra.mxu0 %v945
        %968 = vmatprep.subr.bf16.mxu0 0
        %969 = vmatpush1.bf16.msra.mxu0 %v946
        %970 = vmatprep.subr.bf16.mxu0 0
        %971 = vmatpush1.bf16.msra.mxu0 %v947
        %972 = vmatprep.subr.bf16.mxu0 0
        %973 = vmatpush1.bf16.msra.mxu0 0
        %974 = vmatprep.subr.bf16.mxu0 0
        %975 = vmatpush1.bf16.msra.mxu0 0
        %976 = vmatprep.subr.bf16.mxu0 0
        %977 = vmatpush1.bf16.msra.mxu0 0
        %978 = vmatprep.subr.bf16.mxu0 0
        %979 = vmatpush1.bf16.msra.mxu0 0
        %980 = vmatprep.subr.bf16.mxu0 0
        %981 = vmatpush1.bf16.msra.mxu0 0
        %982 = vmatprep.subr.bf16.mxu0 0
        %983 = vmatpush1.bf16.msra.mxu0 0
        %984 = vmatprep.subr.bf16.mxu0 0
        %985 = vmatpush1.bf16.msra.mxu0 0
        %986 = vmatprep.subr.bf16.mxu0 0
        %987 = vmatpush1.bf16.msra.mxu0 0
        %988 = vmatprep.mubr.bf16.mxu0 0
        %989 = vmatmul.mubr.bf16.gmra.mrb[0].mxu0 %v872
        %v990 = vpop.f32.mrb[0].mxu0
        %v991 = vadd.f32 %v907, %v990
        %v992 = vpop.f32.mrb[0].mxu0
        %v993 = vpop.f32.mrb[0].mxu0
        %v994 = vadd.f32 %v907, %v993
        %v995 = vpop.f32.mrb[0].mxu0
        %996 = vmatprep.mubr.bf16.mxu0 0
        %997 = vmatmul.mubr.bf16.gmra.mrb[0].mxu0 %v873
        %v998 = vpop.f32.mrb[0].mxu0
        %v999 = vadd.f32 %v907, %v998
        %v1000 = vpop.f32.mrb[0].mxu0
        %v1001 = vpop.f32.mrb[0].mxu0
        %v1002 = vadd.f32 %v907, %v1001
        %v1003 = vpop.f32.mrb[0].mxu0
        %1004 = vmatprep.mubr.bf16.mxu0 0
        %1005 = vmatmul.mubr.bf16.gmra.mrb[0].mxu0 %v874
        %v1006 = vpop.f32.mrb[0].mxu0
        %v1007 = vadd.f32 %v907, %v1006
        %v1008 = vpop.f32.mrb[0].mxu0
        %v1009 = vpop.f32.mrb[0].mxu0
        %v1010 = vadd.f32 %v907, %v1009
        %v1011 = vpop.f32.mrb[0].mxu0
        %1012 = vmatprep.mubr.bf16.mxu0 0
        %1013 = vmatmul.mubr.bf16.gmra.mrb[0].mxu0 %v875
        %v1014 = vpop.f32.mrb[0].mxu0
        %v1015 = vadd.f32 %v907, %v1014
        %v1016 = vpop.f32.mrb[0].mxu0
        %v1017 = vpop.f32.mrb[0].mxu0
        %v1018 = vadd.f32 %v907, %v1017
        %v1019 = vpop.f32.mrb[0].mxu0
        %1020 = vmatprep.mubr.bf16.mxu0 0
        %1021 = vmatmul.mubr.bf16.gmra.mrb[0].mxu0 %v876
        %v1022 = vpop.f32.mrb[0].mxu0
        %v1023 = vadd.f32 %v907, %v1022
        %v1024 = vpop.f32.mrb[0].mxu0
        %v1025 = vpop.f32.mrb[0].mxu0
        %v1026 = vadd.f32 %v907, %v1025
        %v1027 = vpop.f32.mrb[0].mxu0
        %1028 = vmatprep.mubr.bf16.mxu0 0
        %1029 = vmatmul.mubr.bf16.gmra.mrb[0].mxu0 %v877
        %v1030 = vpop.f32.mrb[0].mxu0
        %v1031 = vadd.f32 %v907, %v1030
        %v1032 = vpop.f32.mrb[0].mxu0
        %v1033 = vpop.f32.mrb[0].mxu0
        %v1034 = vadd.f32 %v907, %v1033
        %v1035 = vpop.f32.mrb[0].mxu0
        %1036 = vmatprep.mubr.bf16.mxu0 0
        %1037 = vmatmul.mubr.bf16.gmra.mrb[0].mxu0 %v878
        %v1038 = vpop.f32.mrb[0].mxu0
        %v1039 = vadd.f32 %v907, %v1038
        %v1040 = vpop.f32.mrb[0].mxu0
        %v1041 = vpop.f32.mrb[0].mxu0
        %v1042 = vadd.f32 %v907, %v1041
        %v1043 = vpop.f32.mrb[0].mxu0
        %1044 = vmatprep.mubr.bf16.mxu0 0
        %1045 = vmatmul.mubr.bf16.gmra.mrb[0].mxu0 %v879
        %v1046 = vpop.f32.mrb[0].mxu0
        %v1047 = vadd.f32 %v907, %v1046
        %v1048 = vpop.f32.mrb[0].mxu0
        %v1049 = vpop.f32.mrb[0].mxu0
        %v1050 = vadd.f32 %v907, %v1049
        %v1051 = vpop.f32.mrb[0].mxu0
        %1052 = vmatprep.mubr.bf16.mxu0 0
        %1053 = vmatmul.mubr.bf16.gmra.mrb[0].mxu0 %v880
        %v1054 = vpop.f32.mrb[0].mxu0
        %v1055 = vadd.f32 %v907, %v1054
        %v1056 = vpop.f32.mrb[0].mxu0
        %v1057 = vpop.f32.mrb[0].mxu0
        %v1058 = vadd.f32 %v907, %v1057
        %v1059 = vpop.f32.mrb[0].mxu0
        %1060 = vmatprep.mubr.bf16.mxu0 0
        %1061 = vmatmul.mubr.bf16.gmra.mrb[0].mxu0 %v881
        %v1062 = vpop.f32.mrb[0].mxu0
        %v1063 = vadd.f32 %v907, %v1062
        %v1064 = vpop.f32.mrb[0].mxu0
        %v1065 = vpop.f32.mrb[0].mxu0
        %v1066 = vadd.f32 %v907, %v1065
        %v1067 = vpop.f32.mrb[0].mxu0
        %1068 = vmatprep.mubr.bf16.mxu0 0
        %1069 = vmatmul.mubr.bf16.gmra.mrb[0].mxu0 %v882
        %v1070 = vpop.f32.mrb[0].mxu0
        %v1071 = vadd.f32 %v907, %v1070
        %v1072 = vpop.f32.mrb[0].mxu0
        %v1073 = vpop.f32.mrb[0].mxu0
        %v1074 = vadd.f32 %v907, %v1073
        %v1075 = vpop.f32.mrb[0].mxu0
        %1076 = vmatprep.mubr.bf16.mxu0 0
        %1077 = vmatmul.mubr.bf16.gmra.mrb[0].mxu0 %v883
        %v1078 = vpop.f32.mrb[0].mxu0
        %v1079 = vadd.f32 %v907, %v1078
        %v1080 = vpop.f32.mrb[0].mxu0
        %v1081 = vpop.f32.mrb[0].mxu0
        %v1082 = vadd.f32 %v907, %v1081
        %v1083 = vpop.f32.mrb[0].mxu0
        %1084 = vmatprep.mubr.bf16.mxu0 0
        %1085 = vmatmul.mubr.bf16.gmra.mrb[0].mxu0 %v884
        %v1086 = vpop.f32.mrb[0].mxu0
        %v1087 = vadd.f32 %v907, %v1086
        %v1088 = vpop.f32.mrb[0].mxu0
        %v1089 = vpop.f32.mrb[0].mxu0
        %v1090 = vadd.f32 %v907, %v1089
        %v1091 = vpop.f32.mrb[0].mxu0
        %1092 = vmatprep.mubr.bf16.mxu0 0
        %1093 = vmatmul.mubr.bf16.gmra.mrb[0].mxu0 %v885
        %v1094 = vpop.f32.mrb[0].mxu0
        %v1095 = vadd.f32 %v907, %v1094
        %v1096 = vpop.f32.mrb[0].mxu0
        %v1097 = vpop.f32.mrb[0].mxu0
        %v1098 = vadd.f32 %v907, %v1097
        %v1099 = vpop.f32.mrb[0].mxu0
        %1100 = vmatprep.mubr.bf16.mxu0 0
        %1101 = vmatmul.mubr.bf16.gmra.mrb[0].mxu0 %v886
        %v1102 = vpop.f32.mrb[0].mxu0
        %v1103 = vadd.f32 %v907, %v1102
        %v1104 = vpop.f32.mrb[0].mxu0
        %v1105 = vpop.f32.mrb[0].mxu0
        %v1106 = vadd.f32 %v907, %v1105
        %v1107 = vpop.f32.mrb[0].mxu0
        %1108 = vmatprep.mubr.bf16.mxu0 0
        %1109 = vmatmul.mubr.bf16.gmra.mrb[0].mxu0 %v887
        %v1110 = vpop.f32.mrb[0].mxu0
        %v1111 = vadd.f32 %v907, %v1110
        %v1112 = vpop.f32.mrb[0].mxu0
        %v1113 = vpop.f32.mrb[0].mxu0
        %v1114 = vadd.f32 %v907, %v1113
        %v1115 = vpop.f32.mrb[0].mxu0
        %1116 = vdwg.mxu0
        %v1117 = vmax.f32 %v991, 0.0
        %v1118 = vmax.f32 %v994, 0.0
        %v1119 = vmax.f32 %v999, 0.0
        %v1120 = vmax.f32 %v1002, 0.0
        %v1121 = vmax.f32 %v1007, 0.0
        %v1122 = vmax.f32 %v1010, 0.0
        %v1123 = vmax.f32 %v1015, 0.0
        %v1124 = vmax.f32 %v1018, 0.0
        %v1125 = vmax.f32 %v1023, 0.0
        %v1126 = vmax.f32 %v1026, 0.0
        %v1127 = vmax.f32 %v1031, 0.0
        %v1128 = vmax.f32 %v1034, 0.0
        %v1129 = vmax.f32 %v1039, 0.0
        %v1130 = vmax.f32 %v1042, 0.0
        %v1131 = vmax.f32 %v1047, 0.0
        %v1132 = vmax.f32 %v1050, 0.0
        %v1133 = vmax.f32 %v1055, 0.0
        %v1134 = vmax.f32 %v1058, 0.0
        %v1135 = vmax.f32 %v1063, 0.0
        %v1136 = vmax.f32 %v1066, 0.0
        %v1137 = vmax.f32 %v1071, 0.0
        %v1138 = vmax.f32 %v1074, 0.0
        %v1139 = vmax.f32 %v1079, 0.0
        %v1140 = vmax.f32 %v1082, 0.0
        %v1141 = vmax.f32 %v1087, 0.0
        %v1142 = vmax.f32 %v1090, 0.0
        %v1143 = vmax.f32 %v1095, 0.0
        %v1144 = vmax.f32 %v1098, 0.0
        %v1145 = vmax.f32 %v1103, 0.0
        %v1146 = vmax.f32 %v1106, 0.0
        %v1147 = vmax.f32 %v1111, 0.0
        %v1148 = vmax.f32 %v1114, 0.0
        %1150 = vset.pattern.permute.xlu0 0
        %1151 = vperm.xlu0 %1150, %v263
        %v1152 = vpop.permute.xlu0 %1151
        %1154 = vmatprep.subr.mxu0 0.0
        %1155 = vmatpush1.xpose.msra.mxu0 %v1117
        %1156 = vmatprep.subr.mxu0 0.0
        %1157 = vmatpush1.xpose.msra.mxu0 %v1118
        %1158 = vmatprep.subr.mxu0 0.0
        %1159 = vmatpush1.xpose.msra.mxu0 %v1119
        %1160 = vmatprep.subr.mxu0 0.0
        %1161 = vmatpush1.xpose.msra.mxu0 %v1120
        %1162 = vmatprep.subr.mxu0 0.0
        %1163 = vmatpush1.xpose.msra.mxu0 %v1121
        %1164 = vmatprep.subr.mxu0 0.0
        %1165 = vmatpush1.xpose.msra.mxu0 %v1122
        %1166 = vmatprep.subr.mxu0 0.0
        %1167 = vmatpush1.xpose.msra.mxu0 %v1123
        %1168 = vmatprep.subr.mxu0 0.0
        %1169 = vmatpush1.xpose.msra.mxu0 %v1124
        %1170 = vmatprep.subr.mxu0 0.0
        %1171 = vmatpush1.xpose.msra.mxu0 %v1125
        %1172 = vmatprep.subr.mxu0 0.0
        %1173 = vmatpush1.xpose.msra.mxu0 %v1126
        %1174 = vmatprep.subr.mxu0 0.0
        %1175 = vmatpush1.xpose.msra.mxu0 %v1127
        %1176 = vmatprep.subr.mxu0 0.0
        %1177 = vmatpush1.xpose.msra.mxu0 %v1128
        %1178 = vmatprep.subr.mxu0 0.0
        %1179 = vmatpush1.xpose.msra.mxu0 %v1129
        %1180 = vmatprep.subr.mxu0 0.0
        %1181 = vmatpush1.xpose.msra.mxu0 %v1130
        %1182 = vmatprep.subr.mxu0 0.0
        %1183 = vmatpush1.xpose.msra.mxu0 %v1131
        %1184 = vmatprep.subr.mxu0 0.0
        %1185 = vmatpush1.xpose.msra.mxu0 %v1132
        %1186 = vmatprep.subr.mxu0 0.0
        %1187 = vmatpush1.xpose.msra.mxu0 %v1133
        %1188 = vmatprep.subr.mxu0 0.0
        %1189 = vmatpush1.xpose.msra.mxu0 %v1134
        %1190 = vmatprep.subr.mxu0 0.0
        %1191 = vmatpush1.xpose.msra.mxu0 %v1135
        %1192 = vmatprep.subr.mxu0 0.0
        %1193 = vmatpush1.xpose.msra.mxu0 %v1136
        %1194 = vmatprep.subr.mxu0 0.0
        %1195 = vmatpush1.xpose.msra.mxu0 %v1137
        %1196 = vmatprep.subr.mxu0 0.0
        %1197 = vmatpush1.xpose.msra.mxu0 %v1138
        %1198 = vmatprep.subr.mxu0 0.0
        %1199 = vmatpush1.xpose.msra.mxu0 %v1139
        %1200 = vmatprep.subr.mxu0 0.0
        %1201 = vmatpush1.xpose.msra.mxu0 %v1140
        %1202 = vmatprep.subr.mxu0 0.0
        %1203 = vmatpush1.xpose.msra.mxu0 %v1141
        %1204 = vmatprep.subr.mxu0 0.0
        %1205 = vmatpush1.xpose.msra.mxu0 %v1142
        %1206 = vmatprep.subr.mxu0 0.0
        %1207 = vmatpush1.xpose.msra.mxu0 %v1143
        %1208 = vmatprep.subr.mxu0 0.0
        %1209 = vmatpush1.xpose.msra.mxu0 %v1144
        %1210 = vmatprep.subr.mxu0 0.0
        %1211 = vmatpush1.xpose.msra.mxu0 %v1145
        %1212 = vmatprep.subr.mxu0 0.0
        %1213 = vmatpush1.xpose.msra.mxu0 %v1146
        %1214 = vmatprep.subr.mxu0 0.0
        %1215 = vmatpush1.xpose.msra.mxu0 %v1147
        %1216 = vmatprep.subr.mxu0 0.0
        %1217 = vmatpush1.xpose.msra.mxu0 %v1148
        %1218 = vmatprep.mubr.f32.mxu0 0.0
        %1219 = vmatmul.mubr.f32.gmra.mrb[0].mxu0 %v262
        %v1220 = vpop.f32.mrb[0].mxu0
        %v1221 = vadd.f32 %v1152, %v1220
        %v1222 = vpop.f32.mrb[0].mxu0
        %v1223 = vadd.f32 %v1152, %v1222
        %1224 = vdwg.mxu0
        %v1227 = vcombine.low %v1221, %v1223
        %v1229 = vunpack.c.l.s4 1966171168
        %v1230 = vunpack.c.0.s8 %v1229
        %v1231 = vlaneseq
        %v1232 = vshrl.u32 %v1231, 7
        %v1233 = vsub.s32 %v1230, %v1232
        %v1234 = vrot.slane %v1227, %v1233
        %v1236 = vunpack.c.l.s4 1966171168
        %v1237 = vunpack.c.0.s8 %v1236
        %v1238 = vlaneseq
        %v1239 = vshrl.u32 %v1238, 7
        %v1240 = vsub.s32 %v1237, %v1239
        %v1241 = vrot.slane %v1234, %v1240
        %v1243 = vlaneseq
        %vm1244 = vcmp.ge.s32.totalorder %v1243, 0
        %vm1245 = vcmp.lt.s32.totalorder %v1243, 256
        %vm1246 = vmand %vm1244, %vm1245
        %1247 = vst.msk [vmem:[%s218] sm:$0x3] %vm1246, %v1241
        %s1248 = sand.u32 %s137, 1
        %s1249 = scalar_lea.sflag [#allocation3], %s1248
        %s1250 = sand.u32 %s137, 1
        %s1251 = smul.addr %s1250, 2
        %s1252 = scalar_lea.vmem [#allocation2], %s1251
        // Predicated region
        $region41: #{tpu_custom_call.1} parent=39 // pred_check
          %p1253 = pneg %p147
        $region42: #{tpu_custom_call.1} parent=39 // pred_check_branch
          %1255 = sbr.rel (%p1253) target = $region44
        $region43: #{tpu_custom_call.1} parent=39 // pred_region
          %s1256 = smul.u32 2, %s19
          %s1258 = ssub.s32 32, 32
          %1259 = vsyncadd %s1249, %s1258
          %s1260 = smul.addr %s1256, 16
          %s1261 = scalar_lea.hbm %s5, %s1260
          %s1263 = sshll.u32 %s1252, 4
          %s1264 = int_to_ptr.vmem [resolvable:$true] %s1263
          %1266 = dma.vmem_to_hbm [thread:$0]  %s1264, 32, %s1261, %s1249
        $region44: #{tpu_custom_call.1} parent=39 // pred_fallthru
          _
      $region40: #{tpu_custom_call.1} parent=5 // pred_fallthru
        _
      %p1267 = scmp.le.s32.totalorder 2, %s14
      // Predicated region
      $region45: #{tpu_custom_call.1} parent=5 // pred_check
        %p1268 = pneg %p1267
      $region46: #{tpu_custom_call.1} parent=5 // pred_check_branch
        %1270 = sbr.rel (%p1268) target = $region48
      $region47: #{tpu_custom_call.1} parent=5 // pred_region
        %s1271 = ssub.s32 %s14, 2
        // Predicated region
        $region49: #{tpu_custom_call.1} parent=47 // pred_check
          %p1272 = pneg %p153
        $region50: #{tpu_custom_call.1} parent=47 // pred_check_branch
          %1274 = sbr.rel (%p1272) target = $region52
        $region51: #{tpu_custom_call.1} parent=47 // pred_region
          %s1275 = sand.u32 %s138, 1
          %s1276 = scalar_lea.sflag [#allocation3], %s1275
          %s1277 = sand.u32 %s138, 1
          %s1278 = smul.addr %s1277, 2
          %s1279 = scalar_lea.vmem [#allocation2], %s1278
          %1280 = dma.done %s1276, 32
        $region52: #{tpu_custom_call.1} parent=47 // pred_fallthru
          _
      $region48: #{tpu_custom_call.1} parent=5 // pred_fallthru
        _
    $region6: #{tpu_custom_call.1} parent=1 // loop_footer
      %s18 = sadd.s32 1, %s14
    $region7: #{tpu_custom_call.1} parent=1 // loop_footer_branch
      %13 = sbr.rel target = $region3
    $region8: #{tpu_custom_call.1} parent=1 // loop_exit
      _
    %1281 = vsyncpa [#allocation3], 1
    %s1282 = scalar_lea.sflag [#allocation3], 1
    %1283 = vsyncpa %s1282, 1

</llo_original>
